<compile_context>
chip_gen: v6e
topology: v6e:2x2x1
jax: 0.10.0
libtpu: 0.0.40
codegen_flags: <defaults>
</compile_context>

<pallas_src>
import functools

import jax
import jax.numpy as jnp
from jax.experimental import pallas as pl
from jax.experimental.pallas import tpu as pltpu


def _unfold_nchw(x, kh, kw, stride, padding):
    """torch.nn.Unfold equivalent: [B, C*kh*kw, OH*OW], channel-major patch order."""
    B, C, H, W = x.shape
    xp = jnp.pad(x, ((0, 0), (0, 0), (padding, padding), (padding, padding)))
    OH = (H + 2 * padding - kh) // stride + 1
    OW = (W + 2 * padding - kw) // stride + 1
    cols = []
    for i in range(kh):
        for j in range(kw):
            cols.append(xp[:, :, i:i + stride * OH:stride, j:j + stride * OW:stride])
    patches = jnp.stack(cols, axis=2)                       # [B, C, kh*kw, OH, OW]
    return patches.reshape(B, C * kh * kw, OH * OW), OH, OW


def _masked_conv_kernel(p_ref, w_ref, b_ref, act_ref, o_ref):
    # p_ref:   (K, tm)  bf16  im2col patches, output positions on the lane axis
    # w_ref:   (O, K)   bf16  resident weight
    # b_ref:   (O, 1)   f32   resident bias
    # act_ref: (1, tm)  bf16  0/1 active flag per output position (lane-dense)
    # o_ref:   (O, tm)  f32   lane-dense output tile (no lane padding)
    acc = jnp.dot(w_ref[...], p_ref[...],
                  preferred_element_type=jnp.float32)       # MXU, f32 accumulate
    acc = acc + b_ref[...]                                  # bias (lane broadcast)
    gate = act_ref[...].astype(jnp.float32)                 # (1, tm) 0/1
    o_ref[...] = (acc * gate).astype(o_ref.dtype)


def _tensorcores_per_device():
    """Best-effort TC-per-chip query; defaults to 1 (v5e/v6e)."""
    try:
        kind = str(getattr(jax.devices()[0], "device_kind", "")).lower()
        if ("v4" in kind) or ("v5p" in kind) or ("7" in kind):   # dual-TC chips
            return 2
    except Exception:
        pass
    return 1


def _round_up(a, b):
    return ((a + b - 1) // b) * b


def _choose_tiling(M, K, O, cores):
    """Pick (tm, Mp, steps): tm multiple of 128, Mp = steps * tm >= M."""
    # double-buffered streaming bytes per output position (patches + gate + out)
    per_row = 2 * (K * 2 + 2 + O * 4)
    budget = 40 << 20                      # conservative vs 64 MiB (v7x) physical VMEM
    cap = max(128, min(8192, (budget // per_row) // 128 * 128))
    if cores >= 2:
        # >= 2 grid steps and an even count so both TensorCores get equal work
        steps = max(2, 2 * ((_round_up(M, 128) + 2 * cap - 1) // (2 * cap)))
        tm = _round_up(pl.cdiv(M, steps), 128)
        Mp = steps * tm
    else:
        # single TC: the grid is a serial loop -> biggest tile, no forced split
        tm = min(cap, _round_up(M, 128))
        Mp = _round_up(M, tm)
        steps = Mp // tm
    return tm, Mp, steps


def masked_conv2d(x, mask, weight, bias, *, stride=1, padding=0):
    """x, mask: [B, C, H, W] (NCHW); weight: [O, C, KH, KW]; bias: [O]."""
    B, C, H, W = x.shape
    O, _, KH, KW = weight.shape
    K = C * KH * KW

    # --- im2col on x, transposed so output positions land on the lane axis ------
    patches, OH, OW = _unfold_nchw(x, KH, KW, stride, padding)        # [B, K, L]
    L = OH * OW
    M = B * L
    patches_t = jnp.transpose(patches, (1, 0, 2)).reshape(K, M).astype(jnp.bfloat16)

    # --- active flag: torch.any(Unfold(mask) != 0, dim=2) (channels AND window) -
    m_any = jnp.any(mask != 0, axis=1).astype(jnp.float32)            # [B, H, W]
    act = jax.lax.reduce_window(
        m_any, 0.0, jax.lax.max,
        window_dimensions=(1, KH, KW),
        window_strides=(1, stride, stride),
        padding=((0, 0), (padding, padding), (padding, padding)))     # [B, OH, OW]
    active = act.reshape(1, M).astype(jnp.bfloat16)                   # 0/1, lane-dense

    # --- generation-aware tiling over the output-position axis ------------------
    cores = _tensorcores_per_device()
    tm, Mp, steps = _choose_tiling(M, K, O, cores)
    if Mp != M:
        # padded columns have active == 0 -> output 0, sliced off below
        patches_t = jnp.pad(patches_t, ((0, 0), (0, Mp - M)))
        active = jnp.pad(active, ((0, 0), (0, Mp - M)))

    w_ok = weight.reshape(O, K).astype(jnp.bfloat16)                  # [O, K] resident
    b2d = bias.reshape(O, 1).astype(jnp.float32)                      # [O, 1] resident

    # VMEM limit derived from actual tile bytes (double-buffered streams + resident)
    needed = 2 * tm * (K * 2 + 2 + O * 4) + 2 * (K * O * 2 + O * 4)
    vmem_limit = int(min(64 << 20, max(32 << 20, 2 * needed)))

    cost = pl.CostEstimate(
        flops=2 * Mp * K * O,
        transcendentals=0,
        bytes_accessed=(K * Mp * 2       # patches (bf16)
                        + Mp * 2         # active gate (bf16)
                        + K * O * 2      # weight (bf16)
                        + O * 4          # bias (f32)
                        + O * Mp * 4))   # output (f32, unpadded lanes)

    out = pl.pallas_call(
        _masked_conv_kernel,
        out_shape=jax.ShapeDtypeStruct((O, Mp), jnp.float32),
        grid_spec=pltpu.PrefetchScalarGridSpec(
            num_scalar_prefetch=0,
            grid=(steps,),
            in_specs=[
                pl.BlockSpec((K, tm), lambda i: (0, i)),   # patches tile (bf16)
                pl.BlockSpec((O, K), lambda i: (0, 0)),    # weight, resident
                pl.BlockSpec((O, 1), lambda i: (0, 0)),    # bias, resident
                pl.BlockSpec((1, tm), lambda i: (0, i)),   # active gate tile
            ],
            out_specs=pl.BlockSpec((O, tm), lambda i: (0, i)),
        ),
        compiler_params=pltpu.CompilerParams(
            dimension_semantics=("parallel",),
            vmem_limit_bytes=vmem_limit,
            # let XLA fuse the im2col transpose/cast/pad into the patches operand
            allow_input_fusion=[True, False, False, False]),
        cost_estimate=cost,
    )(patches_t, w_ok, b2d, active)

    out = out[:, :M]                                                  # drop column pad
    out = out.reshape(O, B, L)
    out = jnp.transpose(out, (1, 0, 2)).reshape(B, O, OH, OW)         # NCHW out
    return out


if __name__ == "__main__":
    # Module config: in_channels=4, out_channels=8, kernel_size=3, stride=1, padding=1
    B, C, H, W = 2, 4, 16, 16
    O, KH, KW = 8, 3, 3
    stride, padding = 1, 1

    key = jax.random.PRNGKey(0)
    kx, km, kw, kb = jax.random.split(key, 4)

    x = jax.random.normal(kx, (B, C, H, W), dtype=jnp.float32)
    # sparse binary mask (same shape as x, as unfolded by the module)
    mask = (jax.random.uniform(km, (B, C, H, W)) > 0.7).astype(jnp.float32)

    # Deterministic Conv2d-style parameter init (synthetic, not a checkpoint).
    fan_in = C * KH * KW
    bound = 1.0 / (fan_in ** 0.5)
    weight = jax.random.uniform(kw, (O, C, KH, KW), minval=-bound, maxval=bound,
                                dtype=jnp.float32)
    bias = jax.random.uniform(kb, (O,), minval=-bound, maxval=bound, dtype=jnp.float32)

    run = functools.partial(masked_conv2d, stride=stride, padding=padding)

    # masked path
    y_masked = run(x, mask, weight, bias)
    jax.block_until_ready(y_masked)
    assert y_masked.shape == (B, O, H, W)

    # mask-all-ones path (equivalent to plain Conv2d)
    y_full = run(x, jnp.ones_like(mask), weight, bias)
    jax.block_until_ready(y_full)
    assert y_full.shape == (B, O, H, W)

    # references (f32 conv); bf16 MXU inputs -> loosened tolerance
    ref = jax.lax.conv_general_dilated(
        x, weight, window_strides=(stride, stride),
        padding=[(padding, padding), (padding, padding)],
        dimension_numbers=("NCHW", "OIHW", "NCHW")) + bias.reshape(1, O, 1, 1)
    assert jnp.allclose(y_full, ref, atol=1e-2, rtol=1e-2)

    # masked-path reference: conv gated by receptive-field any(mask != 0)
    m_any = jnp.any(mask != 0, axis=1, keepdims=True).astype(jnp.float32)
    act = jax.lax.reduce_window(
        m_any, 0.0, jax.lax.max,
        window_dimensions=(1, 1, KH, KW), window_strides=(1, 1, stride, stride),
        padding=((0, 0), (0, 0), (padding, padding), (padding, padding)))
    ref_masked = jnp.where(act > 0, ref, 0.0)
    assert jnp.allclose(y_masked, ref_masked, atol=1e-2, rtol=1e-2)

    print("KERNEL_OK")
</pallas_src>

<mosaic_0001>
module attributes {stable_mosaic.version = 11 : i64} {
  func.func @_masked_conv_kernel(%arg0: i32, %arg1: memref<36x512xbf16, #tpu.memory_space<vmem>>, %arg2: memref<8x36xbf16, #tpu.memory_space<vmem>>, %arg3: memref<8x1xf32, #tpu.memory_space<vmem>>, %arg4: memref<1x512xbf16, #tpu.memory_space<vmem>>, %arg5: memref<8x512xf32, #tpu.memory_space<vmem>>) attributes {dimension_semantics = [#tpu.dimension_semantics<parallel>], iteration_bounds = array<i64: 1>, scalar_prefetch = 0 : i64, scratch_operands = 0 : i64, tpu.core_type = #tpu.core_type<tc>, window_params = [{transform_indices = @transform_0, window_bounds = array<i64: 36, 512>}, {pipeline_mode = #tpu.pipeline_mode<synchronous>, transform_indices = @transform_1, window_bounds = array<i64: 8, 36>}, {pipeline_mode = #tpu.pipeline_mode<synchronous>, transform_indices = @transform_2, window_bounds = array<i64: 8, 1>}, {transform_indices = @transform_3, window_bounds = array<i64: 1, 512>}, {transform_indices = @transform_4, window_bounds = array<i64: 8, 512>}]} {
    %c0 = arith.constant 0 : index
    %c0_0 = arith.constant 0 : index
    %0 = vector.load %arg2[%c0, %c0_0] : memref<8x36xbf16, #tpu.memory_space<vmem>>, vector<8x36xbf16>
    %c0_1 = arith.constant 0 : index
    %c0_2 = arith.constant 0 : index
    %1 = vector.load %arg1[%c0_1, %c0_2] : memref<36x512xbf16, #tpu.memory_space<vmem>>, vector<36x512xbf16>
    %cst = arith.constant dense<0.000000e+00> : vector<8x512xf32>
    %2 = tpu.matmul %0, %1, %cst {dimension_numbers = #tpu.dot_dimension_numbers<[1], [0], [0], [1], [0, 0, 1, 1], [], []>} : vector<8x36xbf16>, vector<36x512xbf16>, vector<8x512xf32> -> vector<8x512xf32>
    %c0_3 = arith.constant 0 : index
    %c0_4 = arith.constant 0 : index
    %3 = vector.load %arg3[%c0_3, %c0_4] : memref<8x1xf32, #tpu.memory_space<vmem>>, vector<8x1xf32>
    %4 = vector.broadcast %3 : vector<8x1xf32> to vector<8x512xf32>
    %5 = arith.addf %2, %4 : vector<8x512xf32>
    %c0_5 = arith.constant 0 : index
    %c0_6 = arith.constant 0 : index
    %6 = vector.load %arg4[%c0_5, %c0_6] : memref<1x512xbf16, #tpu.memory_space<vmem>>, vector<1x512xbf16>
    %7 = arith.extf %6 : vector<1x512xbf16> to vector<1x512xf32>
    %8 = vector.broadcast %7 : vector<1x512xf32> to vector<8x512xf32>
    %9 = arith.mulf %5, %8 : vector<8x512xf32>
    %c0_7 = arith.constant 0 : index
    %c0_8 = arith.constant 0 : index
    %10 = vector.load %arg5[%c0_7, %c0_8] : memref<8x512xf32, #tpu.memory_space<vmem>>, vector<8x512xf32>
    tpu.vector_store %arg5[%c0_7, %c0_8], %9 {strides = array<i32>} : memref<8x512xf32, #tpu.memory_space<vmem>>, vector<8x512xf32>,
    return
  }
  func.func @transform_0(%arg0: i32) -> (i32, i32) {
    %c0_i32 = arith.constant 0 : i32
    %c0_i32_0 = arith.constant 0 : i32
    return %c0_i32, %arg0 : i32, i32
  }
  func.func @transform_1(%arg0: i32) -> (i32, i32) {
    %c0_i32 = arith.constant 0 : i32
    %c0_i32_0 = arith.constant 0 : i32
    %c0_i32_1 = arith.constant 0 : i32
    return %c0_i32, %c0_i32_0 : i32, i32
  }
  func.func @transform_2(%arg0: i32) -> (i32, i32) {
    %c0_i32 = arith.constant 0 : i32
    %c0_i32_0 = arith.constant 0 : i32
    %c0_i32_1 = arith.constant 0 : i32
    return %c0_i32, %c0_i32_0 : i32, i32
  }
  func.func @transform_3(%arg0: i32) -> (i32, i32) {
    %c0_i32 = arith.constant 0 : i32
    %c0_i32_0 = arith.constant 0 : i32
    return %c0_i32, %arg0 : i32, i32
  }
  func.func @transform_4(%arg0: i32) -> (i32, i32) {
    %c0_i32 = arith.constant 0 : i32
    %c0_i32_0 = arith.constant 0 : i32
    return %c0_i32, %arg0 : i32, i32
  }
}

</mosaic_0001>

<llo_original>
// kernel: tpu_custom_call.1
$region0: #{tpu_custom_call.1}
  #allocation0 [shape = 'u32[]', space=smem, size = 0x4, offset = 0x4, fixed_abs, tag = 'smem constant byte address 0x4 - core index']
  #allocation1 [shape = 'u32[144,128]{1,0:T(1,128)}', space=vmem, size = 0x12000, scoped, tag = 'internal scratch']
  %s0 = inlined_call_operand.hbm [shape: bf16[36,512], index: 0, kind: input, shape index: {}]
  %s1 = inlined_call_operand.vmem [shape: bf16[8,36], index: 1, kind: input, shape index: {}]
  %s2 = inlined_call_operand.vmem [shape: f32[8,1], index: 2, kind: input, shape index: {}]
  %s3 = inlined_call_operand.vmem [shape: bf16[1,512], index: 3, kind: input, shape index: {}]
  %s4 = inlined_call_operand.hbm [shape: f32[8,512], index: 4, kind: output, shape index: {}]
  %s5 = sld [smem:[#allocation0]]
  $region30: #{tpu_custom_call.1} parent=0
    _
  %s7 = ssub.s32 1, %s5
  %s8 = scalar_select 0, %s7, %s5
  $region1: #{tpu_custom_call.1} parent=0
    #allocation2 [shape = 'u8[40960]{0}', space=vmem, size = 0xa000, scoped, tag = 'input window, operand 0, single buffered']
    #allocation3 [shape = 's32[1]{0}', space=sflag, size = 0x4, scoped, tag = 'scoped memory for tpu_custom_call.1']
    #allocation4 [shape = 's32[1]{0}', space=sflag, size = 0x4, scoped, tag = 'scoped memory for tpu_custom_call.1']
    #allocation5 [shape = 'u8[16384]{0}', space=vmem, size = 0x4000, scoped, tag = 'output window, operand 0, single buffered']
    %9 = vsyncpa [#allocation3], 0
    %10 = vsyncpa [#allocation4], 0
    // Predicated region
    $region2: #{tpu_custom_call.1} parent=1 // pred_check
      _
    $region3: #{tpu_custom_call.1} parent=1 // pred_check_branch
      %12 = sbr.rel (0) target = $region5
    $region4: #{tpu_custom_call.1} parent=1 // pred_region
      %s14 = ssub.s32 1280, 1280
      %15 = vsyncadd [#allocation3], %s14
      %s16 = sshll.u32 [#allocation2], 4
      %s17 = int_to_ptr.vmem [resolvable:$true] %s16
      %22 = dma.hbm_to_vmem [thread:$0]  %s0, 1280, %s17, [#allocation3], 256, 256, 16
    $region5: #{tpu_custom_call.1} parent=1 // pred_fallthru
      _
    // Predicated region
    $region6: #{tpu_custom_call.1} parent=1 // pred_check
      _
    $region7: #{tpu_custom_call.1} parent=1 // pred_check_branch
      %24 = sbr.rel (0) target = $region9
    $region8: #{tpu_custom_call.1} parent=1 // pred_region
      _
    $region9: #{tpu_custom_call.1} parent=1 // pred_fallthru
      _
    // Predicated region
    $region10: #{tpu_custom_call.1} parent=1 // pred_check
      _
    $region11: #{tpu_custom_call.1} parent=1 // pred_check_branch
      %26 = sbr.rel (0) target = $region13
    $region12: #{tpu_custom_call.1} parent=1 // pred_region
      _
    $region13: #{tpu_custom_call.1} parent=1 // pred_fallthru
      _
    // Predicated region
    $region14: #{tpu_custom_call.1} parent=1 // pred_check
      _
    $region15: #{tpu_custom_call.1} parent=1 // pred_check_branch
      %28 = sbr.rel (0) target = $region17
    $region16: #{tpu_custom_call.1} parent=1 // pred_region
      _
    $region17: #{tpu_custom_call.1} parent=1 // pred_fallthru
      _
    // Predicated region
    $region18: #{tpu_custom_call.1} parent=1 // pred_check
      _
    $region19: #{tpu_custom_call.1} parent=1 // pred_check_branch
      %30 = sbr.rel (0) target = $region21
    $region20: #{tpu_custom_call.1} parent=1 // pred_region
      %31 = dma.done [#allocation3], 1280
    $region21: #{tpu_custom_call.1} parent=1 // pred_fallthru
      _
    %v33 = vld [vmem:[%s1] sm:$0xf]
    %v34 = vld [vmem:[#allocation2] sm:$0xff]
    %v35 = vld [vmem:[#allocation2 + $0x8] sm:$0xff]
    %v36 = vld [vmem:[#allocation2 + $0x10] sm:$0xff]
    %v37 = vld [vmem:[#allocation2 + $0x18] sm:$0xff]
    %v38 = vld [vmem:[#allocation2 + $0x20] sm:$0xff]
    %v39 = vld [vmem:[#allocation2 + $0x28] sm:$0xff]
    %v40 = vld [vmem:[#allocation2 + $0x30] sm:$0xff]
    %v41 = vld [vmem:[#allocation2 + $0x38] sm:$0xff]
    %v42 = vld [vmem:[#allocation2 + $0x40] sm:$0x33]
    %v43 = vld [vmem:[#allocation2 + $0x48] sm:$0x33]
    %v44 = vld [vmem:[%s2] sm:$0xff]
    %46 = vset.pattern.permute.xlu0 0
    %47 = vperm.xlu0 %46, %v44
    %v48 = vpop.permute.xlu0 %47
    %v60 = vunpack.c.l.b16 %v34
    %v61 = vunpack.c.h.b16 %v34
    %v62 = vunpack.c.l.b16 %v35
    %v63 = vunpack.c.h.b16 %v35
    %v64 = vunpack.c.l.b16 %v36
    %v65 = vunpack.c.h.b16 %v36
    %v66 = vunpack.c.l.b16 %v37
    %v67 = vunpack.c.h.b16 %v37
    %v68 = vunpack.c.l.b16 %v38
    %v69 = vunpack.c.h.b16 %v38
    %v70 = vunpack.c.l.b16 %v39
    %v71 = vunpack.c.h.b16 %v39
    %v72 = vunpack.c.l.b16 %v40
    %v73 = vunpack.c.h.b16 %v40
    %v74 = vunpack.c.l.b16 %v41
    %v75 = vunpack.c.h.b16 %v41
    %v76 = vunpack.c.l.b16 %v42
    %v77 = vunpack.c.h.b16 %v42
    %v78 = vunpack.c.l.b16 %v43
    %v79 = vunpack.c.h.b16 %v43
    %v80 = vpack.c.b16 %v64, %v60
    %v81 = vpack.c.b16 %v65, %v61
    %v82 = vpack.c.b16 %v66, %v62
    %v83 = vpack.c.b16 %v67, %v63
    %v84 = vpack.c.b16 %v72, %v68
    %v85 = vpack.c.b16 %v73, %v69
    %v86 = vpack.c.b16 %v74, %v70
    %v87 = vpack.c.b16 %v75, %v71
    %v88 = vpack.c.b16 %v76, %v76
    %v89 = vpack.c.b16 %v77, %v77
    %v90 = vpack.c.b16 %v78, %v78
    %v91 = vpack.c.b16 %v79, %v79
    %vm100 = vcmask 293888
    %v102 = vsel %vm100, %v33, 0
    %vm104 = vcmask 1041408
    %v106 = vsel %vm104, %v88, 0
    %v109 = vsel %vm104, %v89, 0
    %v112 = vsel %vm104, %v90, 0
    %v115 = vsel %vm104, %v91, 0
    %117 = vmatprep.subr.bf16.mxu0 0
    %118 = vmatpush1.bf16.msra.mxu0 0
    %119 = vmatprep.subr.bf16.mxu0 0
    %120 = vmatpush1.bf16.msra.mxu0 0
    %121 = vmatprep.subr.bf16.mxu0 0
    %122 = vmatpush1.bf16.msra.mxu0 0
    %123 = vmatprep.subr.bf16.mxu0 0
    %124 = vmatpush1.bf16.msra.mxu0 0
    %125 = vmatprep.subr.bf16.mxu0 0
    %126 = vmatpush1.bf16.msra.mxu0 0
    %127 = vmatprep.subr.bf16.mxu0 %v109
    %128 = vmatpush1.bf16.msra.mxu0 %v106
    %129 = vmatprep.subr.bf16.mxu0 %v85
    %130 = vmatpush1.bf16.msra.mxu0 %v84
    %131 = vmatprep.subr.bf16.mxu0 %v81
    %132 = vmatpush1.bf16.msra.mxu0 %v80
    %133 = vmatprep.subr.bf16.mxu0 0
    %134 = vmatpush2.bf16.msra.mxu0 0
    %135 = vmatprep.subr.bf16.mxu0 0
    %136 = vmatpush2.bf16.msra.mxu0 0
    %137 = vmatprep.subr.bf16.mxu0 0
    %138 = vmatpush2.bf16.msra.mxu0 0
    %139 = vmatprep.subr.bf16.mxu0 0
    %140 = vmatpush2.bf16.msra.mxu0 0
    %141 = vmatprep.subr.bf16.mxu0 0
    %142 = vmatpush2.bf16.msra.mxu0 0
    %143 = vmatprep.subr.bf16.mxu0 0
    %144 = vmatpush2.bf16.msra.mxu0 0
    %145 = vmatprep.subr.bf16.mxu0 0
    %146 = vmatpush2.bf16.msra.mxu0 0
    %147 = vmatprep.subr.bf16.mxu0 0
    %148 = vmatpush2.bf16.msra.mxu0 0
    %149 = vmatprep.mubr.bf16.mxu0 0
    %150 = vmatmul.mubr.bf16.gmra.mxu0 %v102
    %v151 = vpop.f32.mrf.mxu0
    %v152 = vadd.f32 %v48, %v151
    %v153 = vpop.f32.mrf.mxu0
    %v154 = vadd.f32 %v48, %v153
    %v155 = vpop.f32.mrf.mxu0
    %v156 = vpop.f32.mrf.mxu0
    %157 = vdwg.mxu0
    %158 = vmatprep.subr.bf16.mxu0 0
    %159 = vmatpush1.bf16.msra.mxu0 0
    %160 = vmatprep.subr.bf16.mxu0 0
    %161 = vmatpush1.bf16.msra.mxu0 0
    %162 = vmatprep.subr.bf16.mxu0 0
    %163 = vmatpush1.bf16.msra.mxu0 0
    %164 = vmatprep.subr.bf16.mxu0 0
    %165 = vmatpush1.bf16.msra.mxu0 0
    %166 = vmatprep.subr.bf16.mxu0 0
    %167 = vmatpush1.bf16.msra.mxu0 0
    %168 = vmatprep.subr.bf16.mxu0 %v115
    %169 = vmatpush1.bf16.msra.mxu0 %v112
    %170 = vmatprep.subr.bf16.mxu0 %v87
    %171 = vmatpush1.bf16.msra.mxu0 %v86
    %172 = vmatprep.subr.bf16.mxu0 %v83
    %173 = vmatpush1.bf16.msra.mxu0 %v82
    %174 = vmatprep.subr.bf16.mxu0 0
    %175 = vmatpush2.bf16.msra.mxu0 0
    %176 = vmatprep.subr.bf16.mxu0 0
    %177 = vmatpush2.bf16.msra.mxu0 0
    %178 = vmatprep.subr.bf16.mxu0 0
    %179 = vmatpush2.bf16.msra.mxu0 0
    %180 = vmatprep.subr.bf16.mxu0 0
    %181 = vmatpush2.bf16.msra.mxu0 0
    %182 = vmatprep.subr.bf16.mxu0 0
    %183 = vmatpush2.bf16.msra.mxu0 0
    %184 = vmatprep.subr.bf16.mxu0 0
    %185 = vmatpush2.bf16.msra.mxu0 0
    %186 = vmatprep.subr.bf16.mxu0 0
    %187 = vmatpush2.bf16.msra.mxu0 0
    %188 = vmatprep.subr.bf16.mxu0 0
    %189 = vmatpush2.bf16.msra.mxu0 0
    %190 = vmatprep.mubr.bf16.mxu0 0
    %191 = vmatmul.mubr.bf16.gmra.mxu0 %v102
    %v192 = vpop.f32.mrf.mxu0
    %v193 = vadd.f32 %v48, %v192
    %v194 = vpop.f32.mrf.mxu0
    %v195 = vadd.f32 %v48, %v194
    %v196 = vpop.f32.mrf.mxu0
    %v197 = vpop.f32.mrf.mxu0
    %198 = vdwg.mxu0
    %v199 = vld [vmem:[%s3] sm:$0xf]
    %v200 = vunpack.c.l.bf16 %v199
    %v202 = vlaneseq
    %v203 = vshrl.u32 %v202, 7
    %v204 = vsub.s32 0, %v203
    %v205 = vrot.slane %v200, %v204
    %v206 = vlaneseq
    %v207 = vshrl.u32 %v206, 7
    %v208 = vsub.s32 2, %v207
    %v209 = vrot.slane %v200, %v208
    %v210 = vlaneseq
    %v211 = vshrl.u32 %v210, 7
    %v212 = vsub.s32 4, %v211
    %v213 = vrot.slane %v200, %v212
    %v214 = vlaneseq
    %v215 = vshrl.u32 %v214, 7
    %v216 = vsub.s32 6, %v215
    %v217 = vrot.slane %v200, %v216
    %v222 = vlaneseq
    %v223 = vshrl.u32 %v222, 7
    %v224 = vsub.s32 0, %v223
    %v225 = vrot.slane %v205, %v224
    %v226 = vlaneseq
    %v227 = vshrl.u32 %v226, 7
    %v228 = vsub.s32 0, %v227
    %v229 = vrot.slane %v209, %v228
    %v230 = vlaneseq
    %v231 = vshrl.u32 %v230, 7
    %v232 = vsub.s32 0, %v231
    %v233 = vrot.slane %v213, %v232
    %v234 = vlaneseq
    %v235 = vshrl.u32 %v234, 7
    %v236 = vsub.s32 0, %v235
    %v237 = vrot.slane %v217, %v236
    %v238 = vmul.f32 %v152, %v225
    %v239 = vmul.f32 %v154, %v229
    %v240 = vmul.f32 %v193, %v233
    %v241 = vmul.f32 %v195, %v237
    %242 = vst [vmem:[#allocation5] sm:$0xff] %v238
    %243 = vst [vmem:[#allocation5 + $0x8] sm:$0xff] %v239
    %244 = vst [vmem:[#allocation5 + $0x10] sm:$0xff] %v240
    %245 = vst [vmem:[#allocation5 + $0x18] sm:$0xff] %v241
    // Predicated region
    $region22: #{tpu_custom_call.1} parent=1 // pred_check
      _
    $region23: #{tpu_custom_call.1} parent=1 // pred_check_branch
      %247 = sbr.rel (0) target = $region25
    $region24: #{tpu_custom_call.1} parent=1 // pred_region
      %s249 = ssub.s32 512, 512
      %250 = vsyncadd [#allocation4], %s249
      %s252 = sshll.u32 [#allocation5], 4
      %s253 = int_to_ptr.vmem [resolvable:$true] %s252
      %255 = dma.vmem_to_hbm [thread:$0]  %s253, 512, %s4, [#allocation4]
    $region25: #{tpu_custom_call.1} parent=1 // pred_fallthru
      _
    // Predicated region
    $region26: #{tpu_custom_call.1} parent=1 // pred_check
      _
    $region27: #{tpu_custom_call.1} parent=1 // pred_check_branch
      %257 = sbr.rel (0) target = $region29
    $region28: #{tpu_custom_call.1} parent=1 // pred_region
      %258 = dma.done [#allocation4], 512
    $region29: #{tpu_custom_call.1} parent=1 // pred_fallthru
      _
    %259 = vsyncpa [#allocation3], 1
    %260 = vsyncpa [#allocation4], 1

</llo_original>
